<compile_context>
chip_gen: v5e
topology: v5e:2x2
jax: 0.10.0
libtpu: 0.0.40
codegen_flags: <defaults>
</compile_context>

<pallas_src>
import jax
import jax.numpy as jnp
from jax.experimental import pallas as pl
from jax.experimental.pallas import tpu as pltpu


def _normalization_kernel(x_ref, sb_ref, o_ref):
    x = x_ref[...].astype(jnp.float32)   # (tile_rows, tile_cols)
    sb = sb_ref[...]                     # (tile_rows, 2) f32: [scale, bias]
    scale = sb[:, 0:1]                   # broadcast across lanes
    bias = sb[:, 1:2]
    o_ref[...] = (x * scale + bias).astype(o_ref.dtype)


def _largest_divisor(n, unit, limit):
    """Largest divisor of `n` that is a multiple of `unit` and <= limit (0 if none)."""
    best = 0
    d = unit
    cap = min(n, limit)
    while d <= cap:
        if n % d == 0:
            best = d
        d += unit
    return best


def _pick_tiles(rows, hw, itemsize, max_block_bytes):
    """Pick (tile_rows, tile_cols) respecting the (sublane, 128) constraint.

    Prefers full-width row tiles (contiguous DMAs); falls back to lane-axis
    (column) tiling when rows cannot be split or a single row-tile would
    exceed the block budget (the canonical C=3, large H*W case).
    """
    # dtype-aware sublane floor: f32 -> 8, bf16 -> 16, int8/fp8 -> 32.
    sublane_floor = 8 * (4 // max(itemsize, 1))

    row_bytes = hw * itemsize
    if rows % sublane_floor == 0:
        max_rows_fit = max_block_bytes // max(row_bytes, 1)
        tr = _largest_divisor(rows, sublane_floor, max_rows_fit)
        if tr > 0:
            return tr, hw                       # row tiling, full lane width
        tile_rows = sublane_floor               # one row-tile too big -> tile cols too
    else:
        tile_rows = rows                        # rows not splittable; tile cols only

    if hw % 128 == 0 and hw > 128:
        col_budget = max(max_block_bytes // (tile_rows * itemsize), 128)
        tc = _largest_divisor(hw, 128, col_budget)
        tile_cols = tc if tc > 0 else hw
    else:
        tile_cols = hw                          # full extent is always legal
    return tile_rows, tile_cols


def normalization(img, mean, std, *, max_block_bytes=8 * 1024 * 1024):
    """(img - mean[c]) / std[c] for NCHW `img`; mean/std have C elements."""
    B, C, H, W = img.shape
    mean_f = jnp.asarray(mean).reshape(-1).astype(jnp.float32)
    std_f = jnp.asarray(std).reshape(-1).astype(jnp.float32)
    assert mean_f.shape == (C,) and std_f.shape == (C,), "mean/std must have C elements"

    rows, hw = B * C, H * W
    x2 = img.reshape(rows, hw)

    # Precompute scale/bias in f32: (x - m)/s == x * (1/s) + (-m/s).
    scale = 1.0 / std_f
    bias = -mean_f * scale
    scale_rows = jnp.broadcast_to(scale[None, :], (B, C)).reshape(rows)
    bias_rows = jnp.broadcast_to(bias[None, :], (B, C)).reshape(rows)
    sb = jnp.stack([scale_rows, bias_rows], axis=-1)          # (rows, 2) f32

    tile_rows, tile_cols = _pick_tiles(rows, hw, x2.dtype.itemsize, max_block_bytes)
    grid = (rows // tile_rows, hw // tile_cols)

    out2 = pl.pallas_call(
        _normalization_kernel,
        out_shape=jax.ShapeDtypeStruct((rows, hw), img.dtype),
        grid_spec=pltpu.PrefetchScalarGridSpec(
            num_scalar_prefetch=0,
            grid=grid,
            in_specs=[
                pl.BlockSpec((tile_rows, tile_cols), lambda i, j: (i, j)),
                pl.BlockSpec((tile_rows, 2), lambda i, j: (i, 0)),
            ],
            out_specs=pl.BlockSpec((tile_rows, tile_cols), lambda i, j: (i, j)),
        ),
        compiler_params=pltpu.CompilerParams(
            dimension_semantics=("parallel", "parallel"),
            vmem_limit_bytes=48 << 20,
        ),
    )(x2, sb)

    return out2.reshape(B, C, H, W)


def _reference(img, mean, std):
    C = img.shape[1]
    m = jnp.asarray(mean).reshape(1, C, 1, 1).astype(jnp.float32)
    s = jnp.asarray(std).reshape(1, C, 1, 1).astype(jnp.float32)
    return ((img.astype(jnp.float32) - m) / s).astype(img.dtype)


if __name__ == "__main__":
    key = jax.random.PRNGKey(0)
    k1, k2, k3, k4 = jax.random.split(key, 4)

    # Primary small case (row-tiling path).
    B, C, H, W = 2, 4, 16, 16
    img = jax.random.normal(k1, (B, C, H, W), dtype=jnp.float32)
    mean = jax.random.normal(k2, (C,), dtype=jnp.float32) * 0.1
    std = jax.random.uniform(k3, (C,), dtype=jnp.float32, minval=0.5, maxval=1.5)

    out = normalization(img, mean, std)
    jax.block_until_ready(out)
    ref = _reference(img, mean, std)
    assert out.shape == img.shape and out.dtype == img.dtype
    assert jnp.allclose(out, ref, rtol=1e-6, atol=1e-6), float(
        jnp.max(jnp.abs(out - ref)))

    # Canonical style-transfer shape (rows=3 -> lane-axis tiling path).
    img3 = jax.random.normal(k4, (1, 3, 32, 32), dtype=jnp.float32)
    mean3 = jnp.array([0.485, 0.456, 0.406], dtype=jnp.float32)
    std3 = jnp.array([0.229, 0.224, 0.225], dtype=jnp.float32)
    out3 = normalization(img3, mean3, std3)
    jax.block_until_ready(out3)
    ref3 = _reference(img3, mean3, std3)
    assert jnp.allclose(out3, ref3, rtol=1e-5, atol=1e-5), float(
        jnp.max(jnp.abs(out3 - ref3)))

    print("KERNEL_OK")
</pallas_src>

<mosaic_0001>
module attributes {stable_mosaic.version = 11 : i64} {
  func.func @_normalization_kernel(%arg0: i32, %arg1: i32, %arg2: memref<8x256xf32, #tpu.memory_space<vmem>>, %arg3: memref<8x2xf32, #tpu.memory_space<vmem>>, %arg4: memref<8x256xf32, #tpu.memory_space<vmem>>) attributes {dimension_semantics = [#tpu.dimension_semantics<parallel>, #tpu.dimension_semantics<parallel>], iteration_bounds = array<i64: 1, 1>, scalar_prefetch = 0 : i64, scratch_operands = 0 : i64, tpu.core_type = #tpu.core_type<tc>, window_params = [{transform_indices = @transform_0, window_bounds = array<i64: 8, 256>}, {transform_indices = @transform_1, window_bounds = array<i64: 8, 2>}, {transform_indices = @transform_2, window_bounds = array<i64: 8, 256>}]} {
    %c0 = arith.constant 0 : index
    %c0_0 = arith.constant 0 : index
    %0 = vector.load %arg2[%c0, %c0_0] : memref<8x256xf32, #tpu.memory_space<vmem>>, vector<8x256xf32>
    %c0_1 = arith.constant 0 : index
    %c0_2 = arith.constant 0 : index
    %1 = vector.load %arg3[%c0_1, %c0_2] : memref<8x2xf32, #tpu.memory_space<vmem>>, vector<8x2xf32>
    %2 = vector.extract_strided_slice %1 {offsets = [0, 0], sizes = [8, 1], strides = [1, 1]} : vector<8x2xf32> to vector<8x1xf32>
    %3 = vector.extract_strided_slice %1 {offsets = [0, 1], sizes = [8, 1], strides = [1, 1]} : vector<8x2xf32> to vector<8x1xf32>
    %4 = vector.broadcast %2 : vector<8x1xf32> to vector<8x256xf32>
    %5 = arith.mulf %0, %4 : vector<8x256xf32>
    %6 = vector.broadcast %3 : vector<8x1xf32> to vector<8x256xf32>
    %7 = arith.addf %5, %6 : vector<8x256xf32>
    %c0_3 = arith.constant 0 : index
    %c0_4 = arith.constant 0 : index
    %8 = vector.load %arg4[%c0_3, %c0_4] : memref<8x256xf32, #tpu.memory_space<vmem>>, vector<8x256xf32>
    tpu.vector_store %arg4[%c0_3, %c0_4], %7 {strides = array<i32>} : memref<8x256xf32, #tpu.memory_space<vmem>>, vector<8x256xf32>,
    return
  }
  func.func @transform_0(%arg0: i32, %arg1: i32) -> (i32, i32) {
    %c0_i32 = arith.constant 0 : i32
    return %arg0, %arg1 : i32, i32
  }
  func.func @transform_1(%arg0: i32, %arg1: i32) -> (i32, i32) {
    %c0_i32 = arith.constant 0 : i32
    %c0_i32_0 = arith.constant 0 : i32
    return %arg0, %c0_i32 : i32, i32
  }
  func.func @transform_2(%arg0: i32, %arg1: i32) -> (i32, i32) {
    %c0_i32 = arith.constant 0 : i32
    return %arg0, %arg1 : i32, i32
  }
}

</mosaic_0001>

<llo_original>
// kernel: tpu_custom_call.1
$region0: #{tpu_custom_call.1}
  #allocation0 [shape = 'u32[]', space=smem, size = 0x4, offset = 0x4, fixed_abs, tag = 'smem constant byte address 0x4 - core index']
  #allocation1 [shape = 'u32[72,128]{1,0:T(1,128)}', space=vmem, size = 0x9000, scoped, tag = 'internal scratch']
  %s0 = inlined_call_operand.hbm [shape: f32[8,256], index: 0, kind: input, shape index: {}]
  %s1 = inlined_call_operand.vmem [shape: f32[8,2], index: 1, kind: input, shape index: {}]
  %s2 = inlined_call_operand.hbm [shape: f32[8,256], index: 2, kind: output, shape index: {}]
  %s3 = sld [smem:[#allocation0]]
  $region22: #{tpu_custom_call.1} parent=0
    _
  %s5 = ssub.s32 1, %s3
  %s6 = scalar_select 0, %s5, %s3
  $region1: #{tpu_custom_call.1} parent=0
    #allocation2 [shape = 'u8[8192]{0}', space=vmem, size = 0x2000, scoped, tag = 'input window, operand 0, single buffered']
    #allocation3 [shape = 's32[1]{0}', space=sflag, size = 0x4, scoped, tag = 'scoped memory for tpu_custom_call.1']
    #allocation4 [shape = 's32[1]{0}', space=sflag, size = 0x4, scoped, tag = 'scoped memory for tpu_custom_call.1']
    #allocation5 [shape = 'u8[8192]{0}', space=vmem, size = 0x2000, scoped, tag = 'output window, operand 0, single buffered']
    %7 = vsyncpa [#allocation3], 0
    %8 = vsyncpa [#allocation4], 0
    // Predicated region
    $region2: #{tpu_custom_call.1} parent=1 // pred_check
      _
    $region3: #{tpu_custom_call.1} parent=1 // pred_check_branch
      %10 = sbr.rel (0) target = $region5
    $region4: #{tpu_custom_call.1} parent=1 // pred_region
      %12 = vsyncadd [#allocation3], 0
      %s14 = sshll.u32 %s0, 4
      %s15 = int_to_ptr.hbm [resolvable:$true] %s14
      %s16 = sshll.u32 [#allocation2], 4
      %s17 = int_to_ptr.vmem [resolvable:$true] %s16
      %19 = dma.hbm_to_vmem [thread:$0]  %s15, 256, %s17, [#allocation3]
    $region5: #{tpu_custom_call.1} parent=1 // pred_fallthru
      _
    // Predicated region
    $region6: #{tpu_custom_call.1} parent=1 // pred_check
      _
    $region7: #{tpu_custom_call.1} parent=1 // pred_check_branch
      %21 = sbr.rel (0) target = $region9
    $region8: #{tpu_custom_call.1} parent=1 // pred_region
      _
    $region9: #{tpu_custom_call.1} parent=1 // pred_fallthru
      _
    // Predicated region
    $region10: #{tpu_custom_call.1} parent=1 // pred_check
      _
    $region11: #{tpu_custom_call.1} parent=1 // pred_check_branch
      %23 = sbr.rel (0) target = $region13
    $region12: #{tpu_custom_call.1} parent=1 // pred_region
      %25 = dma.done [#allocation3], 256
    $region13: #{tpu_custom_call.1} parent=1 // pred_fallthru
      _
    %v26 = vld [vmem:[#allocation2] sm:$0xff]
    %v27 = vld [vmem:[#allocation2 + $0x8] sm:$0xff]
    %v28 = vld [vmem:[%s1] sm:$0xff]
    %30 = vset.pattern.permute.xlu0 0
    %31 = vperm.xlu0 %30, %v28
    %v32 = vpop.permute.xlu0 %31
    %v34 = vmul.f32 %v26, %v32
    %v35 = vmul.f32 %v27, %v32
    %36 = vset.pattern.permute.xlu0 1
    %37 = vperm.xlu0 %36, %v28
    %v38 = vpop.permute.xlu0 %37
    %v40 = vadd.f32 %v34, %v38
    %v41 = vadd.f32 %v35, %v38
    %42 = vst [vmem:[#allocation5] sm:$0xff] %v40
    %43 = vst [vmem:[#allocation5 + $0x8] sm:$0xff] %v41
    // Predicated region
    $region14: #{tpu_custom_call.1} parent=1 // pred_check
      _
    $region15: #{tpu_custom_call.1} parent=1 // pred_check_branch
      %45 = sbr.rel (0) target = $region17
    $region16: #{tpu_custom_call.1} parent=1 // pred_region
      %47 = vsyncadd [#allocation4], 0
      %s49 = sshll.u32 [#allocation5], 4
      %s50 = int_to_ptr.vmem [resolvable:$true] %s49
      %s51 = sshll.u32 %s2, 4
      %s52 = int_to_ptr.hbm [resolvable:$true] %s51
      %54 = dma.vmem_to_hbm [thread:$0]  %s50, 256, %s52, [#allocation4]
    $region17: #{tpu_custom_call.1} parent=1 // pred_fallthru
      _
    // Predicated region
    $region18: #{tpu_custom_call.1} parent=1 // pred_check
      _
    $region19: #{tpu_custom_call.1} parent=1 // pred_check_branch
      %56 = sbr.rel (0) target = $region21
    $region20: #{tpu_custom_call.1} parent=1 // pred_region
      %58 = dma.done [#allocation4], 256
    $region21: #{tpu_custom_call.1} parent=1 // pred_fallthru
      _
    %59 = vsyncpa [#allocation3], 1
    %60 = vsyncpa [#allocation4], 1

</llo_original>
